<compile_context>
chip_gen: v7x
topology: tpu7x:2x2x1
jax: 0.10.0
libtpu: 0.0.40
codegen_flags: <defaults>
</compile_context>

<pallas_src>
import functools

import jax
import jax.numpy as jnp
from jax.experimental import pallas as pl
from jax.experimental.pallas import tpu as pltpu


LANE = 128


def _round_up(n, m):
    return ((n + m - 1) // m) * m


def _pad2(a, rows, cols):
    return jnp.pad(a, ((0, rows - a.shape[0]), (0, cols - a.shape[1])))


# -----------------------------------------------------------------------------
# Kernel: one batch tile per grid step; all weights resident in VMEM.
# -----------------------------------------------------------------------------
def vae_kernel(x_ref, w1_ref, b1_ref, wh_ref, bh_ref, w3_ref, b3_ref,
               w4_ref, b4_ref, eps_ref, rex_ref, mu_ref, sigma_ref):
    # ---- Encoder layer 1 (bf16 MXU inputs, f32 accumulation) ----
    h = jnp.dot(x_ref[...], w1_ref[...],
                preferred_element_type=jnp.float32) + b1_ref[...]
    h = jnp.maximum(h, 0.0)                                   # relu (f32 VPU)

    # ---- Fused mu/logvar head: one [hid, 2*lat] matmul ----
    head = jnp.dot(h.astype(jnp.bfloat16), wh_ref[...],
                   preferred_element_type=jnp.float32) + bh_ref[...]
    lat_p = mu_ref.shape[-1]                                  # lane-aligned split point
    mu = head[:, :lat_p]
    sigma = jnp.exp(0.5 * head[:, lat_p:])                    # exp on EUP (f32)

    # ---- Reparameterization: z = mu + eps * sigma (f32 VPU) ----
    z = mu + eps_ref[...] * sigma

    # ---- Decoder ----
    h2 = jnp.dot(z.astype(jnp.bfloat16), w3_ref[...],
                 preferred_element_type=jnp.float32) + b3_ref[...]
    h2 = jnp.maximum(h2, 0.0)                                 # relu
    logits = jnp.dot(h2.astype(jnp.bfloat16), w4_ref[...],
                     preferred_element_type=jnp.float32) + b4_ref[...]

    # Lane-dense stores (all last dims are multiples of 128 -> unmasked vst).
    rex_ref[...] = jax.nn.sigmoid(logits).astype(rex_ref.dtype)
    mu_ref[...] = mu.astype(mu_ref.dtype)
    sigma_ref[...] = sigma.astype(sigma_ref.dtype)


# -----------------------------------------------------------------------------
# Wrapper-side parameter prep: pad to 128 lanes, fuse heads, cast weights to bf16.
# -----------------------------------------------------------------------------
def prepare_params(params, input_size, hidden_size, latent_size, output_size):
    in_p = _round_up(input_size, LANE)
    hid_p = _round_up(hidden_size, LANE)
    lat_p = _round_up(latent_size, LANE)
    out_p = _round_up(output_size, LANE)

    w1 = _pad2(params["w1"], in_p, hid_p).astype(jnp.bfloat16)
    b1 = _pad2(params["b1"], 1, hid_p).astype(jnp.float32)
    whead = jnp.concatenate(
        [_pad2(params["wmu"], hid_p, lat_p), _pad2(params["wls"], hid_p, lat_p)],
        axis=1).astype(jnp.bfloat16)                          # [hid_p, 2*lat_p]
    bhead = jnp.concatenate(
        [_pad2(params["bmu"], 1, lat_p), _pad2(params["bls"], 1, lat_p)],
        axis=1).astype(jnp.float32)                           # [1, 2*lat_p]
    w3 = _pad2(params["w3"], lat_p, hid_p).astype(jnp.bfloat16)
    b3 = _pad2(params["b3"], 1, hid_p).astype(jnp.float32)
    w4 = _pad2(params["w4"], hid_p, out_p).astype(jnp.bfloat16)
    b4 = _pad2(params["b4"], 1, out_p).astype(jnp.float32)

    dims = dict(in_p=in_p, hid_p=hid_p, lat_p=lat_p, out_p=out_p)
    return (w1, b1, whead, bhead, w3, b3, w4, b4), dims


# -----------------------------------------------------------------------------
# Forward: batch-tiled grid, resident weights, lane-dense outputs.
# -----------------------------------------------------------------------------
@functools.partial(jax.jit, static_argnames=("dims_key", "latent_size",
                                             "output_size", "tb"))
def _vae_forward_impl(x, eps, prepped, dims_key, latent_size, output_size, tb):
    in_p, hid_p, lat_p, out_p = dims_key
    (w1, b1, wh, bh, w3, b3, w4, b4) = prepped

    B = x.shape[0]
    tile_b = min(tb, _round_up(B, 8))          # sublane-aligned batch tile
    b_pad = _round_up(B, tile_b)

    x_p = _pad2(x, b_pad, in_p).astype(jnp.bfloat16)
    eps_p = _pad2(eps, b_pad, lat_p).astype(jnp.float32)

    grid = (b_pad // tile_b,)

    batch_spec = lambda shape: pl.BlockSpec(shape, lambda i: (i, 0))
    resident = lambda shape: pl.BlockSpec(shape, lambda i: (0, 0))

    in_specs = [
        batch_spec((tile_b, in_p)),            # x
        resident((in_p, hid_p)),               # w1
        resident((1, hid_p)),                  # b1
        resident((hid_p, 2 * lat_p)),          # fused head weight
        resident((1, 2 * lat_p)),              # fused head bias
        resident((lat_p, hid_p)),              # w3
        resident((1, hid_p)),                  # b3
        resident((hid_p, out_p)),              # w4
        resident((1, out_p)),                  # b4
        batch_spec((tile_b, lat_p)),           # eps
    ]
    out_specs = (
        batch_spec((tile_b, out_p)),           # re_x (padded, lane-dense)
        batch_spec((tile_b, lat_p)),           # mu
        batch_spec((tile_b, lat_p)),           # sigma
    )
    out_shapes = (
        jax.ShapeDtypeStruct((b_pad, out_p), jnp.float32),
        jax.ShapeDtypeStruct((b_pad, lat_p), jnp.float32),
        jax.ShapeDtypeStruct((b_pad, lat_p), jnp.float32),
    )

    rex_pad, mu_pad, sigma_pad = pl.pallas_call(
        vae_kernel,
        grid=grid,
        in_specs=in_specs,
        out_specs=out_specs,
        out_shape=out_shapes,
        compiler_params=pltpu.CompilerParams(
            dimension_semantics=("parallel",),   # shards batch tiles across TCs on v7x
        ),
    )(x_p, w1, b1, wh, bh, w3, b3, w4, b4, eps_p)

    re_x = rex_pad[:B, :output_size]
    mu = mu_pad[:B, :latent_size]
    sigma = sigma_pad[:B, :latent_size]
    return re_x, mu, sigma


def vae_forward(x, prepped, dims, eps, latent_size, output_size, tb=128):
    dims_key = (dims["in_p"], dims["hid_p"], dims["lat_p"], dims["out_p"])
    return _vae_forward_impl(x, eps, prepped, dims_key, latent_size,
                             output_size, tb)


# -----------------------------------------------------------------------------
# Plain f32 init + pure-JAX reference (for a loose correctness check).
# -----------------------------------------------------------------------------
def init_params(key, input_size, hidden_size, latent_size, output_size):
    ks = jax.random.split(key, 5)

    def lin(k, fan_in, fan_out):
        bound = 1.0 / jnp.sqrt(fan_in)
        return jax.random.uniform(k, (fan_in, fan_out), jnp.float32, -bound, bound)

    return {
        "w1":  lin(ks[0], input_size, hidden_size),
        "b1":  jnp.zeros((1, hidden_size), jnp.float32),
        "wmu": lin(ks[1], hidden_size, latent_size),
        "bmu": jnp.zeros((1, latent_size), jnp.float32),
        "wls": lin(ks[2], hidden_size, latent_size),
        "bls": jnp.zeros((1, latent_size), jnp.float32),
        "w3":  lin(ks[3], latent_size, hidden_size),
        "b3":  jnp.zeros((1, hidden_size), jnp.float32),
        "w4":  lin(ks[4], hidden_size, output_size),
        "b4":  jnp.zeros((1, output_size), jnp.float32),
    }


def vae_reference(x, params, eps):
    h = jnp.maximum(x @ params["w1"] + params["b1"], 0.0)
    mu = h @ params["wmu"] + params["bmu"]
    sigma = jnp.exp(0.5 * (h @ params["wls"] + params["bls"]))
    z = mu + eps * sigma
    h2 = jnp.maximum(z @ params["w3"] + params["b3"], 0.0)
    re_x = jax.nn.sigmoid(h2 @ params["w4"] + params["b4"])
    return re_x, mu, sigma


if __name__ == "__main__":
    # Small shapes consistent with an MLP VAE.
    B, INPUT, HIDDEN, LATENT, OUTPUT = 8, 64, 32, 16, 64

    key = jax.random.PRNGKey(0)
    k_x, k_eps, k_p = jax.random.split(key, 3)

    x = jax.random.uniform(k_x, (B, INPUT), jnp.float32)       # [batch, input_size]
    eps = jax.random.normal(k_eps, (B, LATENT), jnp.float32)   # torch.randn_like(sigma)
    params = init_params(k_p, INPUT, HIDDEN, LATENT, OUTPUT)

    prepped, dims = prepare_params(params, INPUT, HIDDEN, LATENT, OUTPUT)

    re_x, mu, sigma = vae_forward(x, prepped, dims, eps, LATENT, OUTPUT)
    jax.block_until_ready((re_x, mu, sigma))

    assert re_x.shape == (B, OUTPUT)
    assert mu.shape == (B, LATENT)
    assert sigma.shape == (B, LATENT)
    assert bool(jnp.all(jnp.isfinite(re_x)))

    # Loose tolerance check against an f32 pure-JAX reference (bf16 MXU inputs).
    re_ref, mu_ref, sg_ref = vae_reference(x, params, eps)
    assert bool(jnp.allclose(re_x, re_ref, atol=5e-2, rtol=5e-2))
    assert bool(jnp.allclose(mu, mu_ref, atol=5e-2, rtol=5e-2))
    assert bool(jnp.allclose(sigma, sg_ref, atol=5e-2, rtol=5e-2))

    print("KERNEL_OK")
</pallas_src>

<mosaic_0001>
module attributes {stable_mosaic.version = 11 : i64} {
  func.func @vae_kernel(%arg0: i32, %arg1: memref<8x128xbf16, #tpu.memory_space<vmem>>, %arg2: memref<128x128xbf16, #tpu.memory_space<vmem>>, %arg3: memref<1x128xf32, #tpu.memory_space<vmem>>, %arg4: memref<128x256xbf16, #tpu.memory_space<vmem>>, %arg5: memref<1x256xf32, #tpu.memory_space<vmem>>, %arg6: memref<128x128xbf16, #tpu.memory_space<vmem>>, %arg7: memref<1x128xf32, #tpu.memory_space<vmem>>, %arg8: memref<128x128xbf16, #tpu.memory_space<vmem>>, %arg9: memref<1x128xf32, #tpu.memory_space<vmem>>, %arg10: memref<8x128xf32, #tpu.memory_space<vmem>>, %arg11: memref<8x128xf32, #tpu.memory_space<vmem>>, %arg12: memref<8x128xf32, #tpu.memory_space<vmem>>, %arg13: memref<8x128xf32, #tpu.memory_space<vmem>>) attributes {dimension_semantics = [#tpu.dimension_semantics<parallel>], iteration_bounds = array<i64: 1>, scalar_prefetch = 0 : i64, scratch_operands = 0 : i64, tpu.core_type = #tpu.core_type<tc>, window_params = [{transform_indices = @transform_0, window_bounds = array<i64: 8, 128>}, {pipeline_mode = #tpu.pipeline_mode<synchronous>, transform_indices = @transform_1, window_bounds = array<i64: 128, 128>}, {pipeline_mode = #tpu.pipeline_mode<synchronous>, transform_indices = @transform_2, window_bounds = array<i64: 1, 128>}, {pipeline_mode = #tpu.pipeline_mode<synchronous>, transform_indices = @transform_3, window_bounds = array<i64: 128, 256>}, {pipeline_mode = #tpu.pipeline_mode<synchronous>, transform_indices = @transform_4, window_bounds = array<i64: 1, 256>}, {pipeline_mode = #tpu.pipeline_mode<synchronous>, transform_indices = @transform_5, window_bounds = array<i64: 128, 128>}, {pipeline_mode = #tpu.pipeline_mode<synchronous>, transform_indices = @transform_6, window_bounds = array<i64: 1, 128>}, {pipeline_mode = #tpu.pipeline_mode<synchronous>, transform_indices = @transform_7, window_bounds = array<i64: 128, 128>}, {pipeline_mode = #tpu.pipeline_mode<synchronous>, transform_indices = @transform_8, window_bounds = array<i64: 1, 128>}, {transform_indices = @transform_9, window_bounds = array<i64: 8, 128>}, {transform_indices = @transform_10, window_bounds = array<i64: 8, 128>}, {transform_indices = @transform_11, window_bounds = array<i64: 8, 128>}, {transform_indices = @transform_12, window_bounds = array<i64: 8, 128>}]} {
    %c0 = arith.constant 0 : index
    %c0_0 = arith.constant 0 : index
    %0 = vector.load %arg1[%c0, %c0_0] : memref<8x128xbf16, #tpu.memory_space<vmem>>, vector<8x128xbf16>
    %c0_1 = arith.constant 0 : index
    %c0_2 = arith.constant 0 : index
    %1 = vector.load %arg2[%c0_1, %c0_2] : memref<128x128xbf16, #tpu.memory_space<vmem>>, vector<128x128xbf16>
    %cst = arith.constant dense<0.000000e+00> : vector<8x128xf32>
    %2 = tpu.matmul %0, %1, %cst {dimension_numbers = #tpu.dot_dimension_numbers<[1], [0], [0], [1], [0, 0, 1, 1], [], []>} : vector<8x128xbf16>, vector<128x128xbf16>, vector<8x128xf32> -> vector<8x128xf32>
    %c0_3 = arith.constant 0 : index
    %c0_4 = arith.constant 0 : index
    %3 = vector.load %arg3[%c0_3, %c0_4] : memref<1x128xf32, #tpu.memory_space<vmem>>, vector<1x128xf32>
    %4 = vector.broadcast %3 : vector<1x128xf32> to vector<8x128xf32>
    %5 = arith.addf %2, %4 : vector<8x128xf32>
    %cst_5 = arith.constant 0.000000e+00 : f32
    %6 = vector.broadcast %cst_5 : f32 to vector<8x128xf32>
    %7 = arith.maximumf %5, %6 : vector<8x128xf32>
    %8 = arith.truncf %7 : vector<8x128xf32> to vector<8x128xbf16>
    %c0_6 = arith.constant 0 : index
    %c0_7 = arith.constant 0 : index
    %9 = vector.load %arg4[%c0_6, %c0_7] : memref<128x256xbf16, #tpu.memory_space<vmem>>, vector<128x256xbf16>
    %cst_8 = arith.constant dense<0.000000e+00> : vector<8x256xf32>
    %10 = tpu.matmul %8, %9, %cst_8 {dimension_numbers = #tpu.dot_dimension_numbers<[1], [0], [0], [1], [0, 0, 1, 1], [], []>} : vector<8x128xbf16>, vector<128x256xbf16>, vector<8x256xf32> -> vector<8x256xf32>
    %c0_9 = arith.constant 0 : index
    %c0_10 = arith.constant 0 : index
    %11 = vector.load %arg5[%c0_9, %c0_10] : memref<1x256xf32, #tpu.memory_space<vmem>>, vector<1x256xf32>
    %12 = vector.broadcast %11 : vector<1x256xf32> to vector<8x256xf32>
    %13 = arith.addf %10, %12 : vector<8x256xf32>
    %14 = vector.extract_strided_slice %13 {offsets = [0, 0], sizes = [8, 128], strides = [1, 1]} : vector<8x256xf32> to vector<8x128xf32>
    %15 = vector.extract_strided_slice %13 {offsets = [0, 128], sizes = [8, 128], strides = [1, 1]} : vector<8x256xf32> to vector<8x128xf32>
    %cst_11 = arith.constant 5.000000e-01 : f32
    %16 = vector.broadcast %cst_11 : f32 to vector<8x128xf32>
    %17 = arith.mulf %16, %15 : vector<8x128xf32>
    %18 = math.exp %17 : vector<8x128xf32>
    %c0_12 = arith.constant 0 : index
    %c0_13 = arith.constant 0 : index
    %19 = vector.load %arg10[%c0_12, %c0_13] : memref<8x128xf32, #tpu.memory_space<vmem>>, vector<8x128xf32>
    %20 = arith.mulf %19, %18 : vector<8x128xf32>
    %21 = arith.addf %14, %20 : vector<8x128xf32>
    %22 = arith.truncf %21 : vector<8x128xf32> to vector<8x128xbf16>
    %c0_14 = arith.constant 0 : index
    %c0_15 = arith.constant 0 : index
    %23 = vector.load %arg6[%c0_14, %c0_15] : memref<128x128xbf16, #tpu.memory_space<vmem>>, vector<128x128xbf16>
    %cst_16 = arith.constant dense<0.000000e+00> : vector<8x128xf32>
    %24 = tpu.matmul %22, %23, %cst_16 {dimension_numbers = #tpu.dot_dimension_numbers<[1], [0], [0], [1], [0, 0, 1, 1], [], []>} : vector<8x128xbf16>, vector<128x128xbf16>, vector<8x128xf32> -> vector<8x128xf32>
    %c0_17 = arith.constant 0 : index
    %c0_18 = arith.constant 0 : index
    %25 = vector.load %arg7[%c0_17, %c0_18] : memref<1x128xf32, #tpu.memory_space<vmem>>, vector<1x128xf32>
    %26 = vector.broadcast %25 : vector<1x128xf32> to vector<8x128xf32>
    %27 = arith.addf %24, %26 : vector<8x128xf32>
    %cst_19 = arith.constant 0.000000e+00 : f32
    %28 = vector.broadcast %cst_19 : f32 to vector<8x128xf32>
    %29 = arith.maximumf %27, %28 : vector<8x128xf32>
    %30 = arith.truncf %29 : vector<8x128xf32> to vector<8x128xbf16>
    %c0_20 = arith.constant 0 : index
    %c0_21 = arith.constant 0 : index
    %31 = vector.load %arg8[%c0_20, %c0_21] : memref<128x128xbf16, #tpu.memory_space<vmem>>, vector<128x128xbf16>
    %cst_22 = arith.constant dense<0.000000e+00> : vector<8x128xf32>
    %32 = tpu.matmul %30, %31, %cst_22 {dimension_numbers = #tpu.dot_dimension_numbers<[1], [0], [0], [1], [0, 0, 1, 1], [], []>} : vector<8x128xbf16>, vector<128x128xbf16>, vector<8x128xf32> -> vector<8x128xf32>
    %c0_23 = arith.constant 0 : index
    %c0_24 = arith.constant 0 : index
    %33 = vector.load %arg9[%c0_23, %c0_24] : memref<1x128xf32, #tpu.memory_space<vmem>>, vector<1x128xf32>
    %34 = vector.broadcast %33 : vector<1x128xf32> to vector<8x128xf32>
    %35 = arith.addf %32, %34 : vector<8x128xf32>
    %36 = arith.negf %35 : vector<8x128xf32>
    %37 = math.exp %36 : vector<8x128xf32>
    %cst_25 = arith.constant 1.000000e+00 : f32
    %38 = vector.broadcast %cst_25 : f32 to vector<8x128xf32>
    %39 = arith.addf %38, %37 : vector<8x128xf32>
    %40 = arith.divf %38, %39 : vector<8x128xf32>
    %c0_26 = arith.constant 0 : index
    %c0_27 = arith.constant 0 : index
    %41 = vector.load %arg11[%c0_26, %c0_27] : memref<8x128xf32, #tpu.memory_space<vmem>>, vector<8x128xf32>
    tpu.vector_store %arg11[%c0_26, %c0_27], %40 {strides = array<i32>} : memref<8x128xf32, #tpu.memory_space<vmem>>, vector<8x128xf32>,
    %c0_28 = arith.constant 0 : index
    %c0_29 = arith.constant 0 : index
    %42 = vector.load %arg12[%c0_28, %c0_29] : memref<8x128xf32, #tpu.memory_space<vmem>>, vector<8x128xf32>
    tpu.vector_store %arg12[%c0_28, %c0_29], %14 {strides = array<i32>} : memref<8x128xf32, #tpu.memory_space<vmem>>, vector<8x128xf32>,
    %c0_30 = arith.constant 0 : index
    %c0_31 = arith.constant 0 : index
    %43 = vector.load %arg13[%c0_30, %c0_31] : memref<8x128xf32, #tpu.memory_space<vmem>>, vector<8x128xf32>
    tpu.vector_store %arg13[%c0_30, %c0_31], %18 {strides = array<i32>} : memref<8x128xf32, #tpu.memory_space<vmem>>, vector<8x128xf32>,
    return
  }
  func.func @transform_0(%arg0: i32) -> (i32, i32) {
    %c0_i32 = arith.constant 0 : i32
    %c0_i32_0 = arith.constant 0 : i32
    return %arg0, %c0_i32 : i32, i32
  }
  func.func @transform_1(%arg0: i32) -> (i32, i32) {
    %c0_i32 = arith.constant 0 : i32
    %c0_i32_0 = arith.constant 0 : i32
    %c0_i32_1 = arith.constant 0 : i32
    return %c0_i32, %c0_i32_0 : i32, i32
  }
  func.func @transform_2(%arg0: i32) -> (i32, i32) {
    %c0_i32 = arith.constant 0 : i32
    %c0_i32_0 = arith.constant 0 : i32
    %c0_i32_1 = arith.constant 0 : i32
    return %c0_i32, %c0_i32_0 : i32, i32
  }
  func.func @transform_3(%arg0: i32) -> (i32, i32) {
    %c0_i32 = arith.constant 0 : i32
    %c0_i32_0 = arith.constant 0 : i32
    %c0_i32_1 = arith.constant 0 : i32
    return %c0_i32, %c0_i32_0 : i32, i32
  }
  func.func @transform_4(%arg0: i32) -> (i32, i32) {
    %c0_i32 = arith.constant 0 : i32
    %c0_i32_0 = arith.constant 0 : i32
    %c0_i32_1 = arith.constant 0 : i32
    return %c0_i32, %c0_i32_0 : i32, i32
  }
  func.func @transform_5(%arg0: i32) -> (i32, i32) {
    %c0_i32 = arith.constant 0 : i32
    %c0_i32_0 = arith.constant 0 : i32
    %c0_i32_1 = arith.constant 0 : i32
    return %c0_i32, %c0_i32_0 : i32, i32
  }
  func.func @transform_6(%arg0: i32) -> (i32, i32) {
    %c0_i32 = arith.constant 0 : i32
    %c0_i32_0 = arith.constant 0 : i32
    %c0_i32_1 = arith.constant 0 : i32
    return %c0_i32, %c0_i32_0 : i32, i32
  }
  func.func @transform_7(%arg0: i32) -> (i32, i32) {
    %c0_i32 = arith.constant 0 : i32
    %c0_i32_0 = arith.constant 0 : i32
    %c0_i32_1 = arith.constant 0 : i32
    return %c0_i32, %c0_i32_0 : i32, i32
  }
  func.func @transform_8(%arg0: i32) -> (i32, i32) {
    %c0_i32 = arith.constant 0 : i32
    %c0_i32_0 = arith.constant 0 : i32
    %c0_i32_1 = arith.constant 0 : i32
    return %c0_i32, %c0_i32_0 : i32, i32
  }
  func.func @transform_9(%arg0: i32) -> (i32, i32) {
    %c0_i32 = arith.constant 0 : i32
    %c0_i32_0 = arith.constant 0 : i32
    return %arg0, %c0_i32 : i32, i32
  }
  func.func @transform_10(%arg0: i32) -> (i32, i32) {
    %c0_i32 = arith.constant 0 : i32
    %c0_i32_0 = arith.constant 0 : i32
    return %arg0, %c0_i32 : i32, i32
  }
  func.func @transform_11(%arg0: i32) -> (i32, i32) {
    %c0_i32 = arith.constant 0 : i32
    %c0_i32_0 = arith.constant 0 : i32
    return %arg0, %c0_i32 : i32, i32
  }
  func.func @transform_12(%arg0: i32) -> (i32, i32) {
    %c0_i32 = arith.constant 0 : i32
    %c0_i32_0 = arith.constant 0 : i32
    return %arg0, %c0_i32 : i32, i32
  }
}

</mosaic_0001>

<llo_original>
// kernel: _vae_forward_impl.1
$region0: #{_vae_forward_impl.1}
  #allocation0 [shape = 'u32[]', space=smem, size = 0x4, offset = 0x4, fixed_abs, tag = 'smem constant byte address 0x4 - core index']
  #allocation1 [shape = 'u32[144,128]{1,0:T(1,128)}', space=vmem, size = 0x12000, scoped, tag = 'internal scratch']
  %s0 = inlined_call_operand.vmem [shape: bf16[8,128], index: 0, kind: input, shape index: {}]
  %s1 = inlined_call_operand.hbm [shape: bf16[128,128], index: 1, kind: input, shape index: {}]
  %s2 = inlined_call_operand.vmem [shape: f32[1,128], index: 2, kind: input, shape index: {}]
  %s3 = inlined_call_operand.hbm [shape: bf16[128,256], index: 3, kind: input, shape index: {}]
  %s4 = inlined_call_operand.vmem [shape: f32[1,256], index: 4, kind: input, shape index: {}]
  %s5 = inlined_call_operand.hbm [shape: bf16[128,128], index: 5, kind: input, shape index: {}]
  %s6 = inlined_call_operand.vmem [shape: f32[1,128], index: 6, kind: input, shape index: {}]
  %s7 = inlined_call_operand.vmem [shape: bf16[128,128], index: 7, kind: input, shape index: {}]
  %s8 = inlined_call_operand.vmem [shape: f32[1,128], index: 8, kind: input, shape index: {}]
  %s9 = inlined_call_operand.vmem [shape: f32[8,128], index: 9, kind: input, shape index: {}]
  %s10 = inlined_call_operand.hbm [shape: f32[8,128], index: 10, kind: output, shape index: {0}]
  %s11 = inlined_call_operand.hbm [shape: f32[8,128], index: 11, kind: output, shape index: {1}]
  %s12 = inlined_call_operand.hbm [shape: f32[8,128], index: 12, kind: output, shape index: {2}]
  %13 = xla_tuple %s10, %s11, %s12
  %s14 = sld [smem:[#allocation0]]
  $region78: #{_vae_forward_impl.1} parent=0
    _
  %s16 = ssub.s32 1, %s14
  %s17 = scalar_select 0, %s16, %s14
  $region1: #{_vae_forward_impl.1} parent=0
    #allocation2 [shape = 'u8[32768]{0}', space=vmem, size = 0x8000, scoped, tag = 'input window, operand 1, single buffered']
    #allocation3 [shape = 's32[1]{0}', space=sflag, size = 0x4, scoped, tag = 'scoped memory for _vae_forward_impl.1']
    #allocation4 [shape = 's32[1]{0}', space=sflag, size = 0x4, scoped, tag = 'scoped memory for _vae_forward_impl.1']
    #allocation5 [shape = 'u8[65536]{0}', space=vmem, size = 0x10000, scoped, tag = 'input window, operand 3, single buffered']
    #allocation6 [shape = 's32[1]{0}', space=sflag, size = 0x4, scoped, tag = 'scoped memory for _vae_forward_impl.1']
    #allocation7 [shape = 'u8[32768]{0}', space=vmem, size = 0x8000, scoped, tag = 'input window, operand 5, single buffered']
    #allocation8 [shape = 'u8[4096]{0}', space=vmem, size = 0x1000, scoped, tag = 'output window, operand 0, single buffered']
    #allocation9 [shape = 'u8[4096]{0}', space=vmem, size = 0x1000, scoped, tag = 'output window, operand 1, single buffered']
    #allocation10 [shape = 's32[1]{0}', space=sflag, size = 0x4, scoped, tag = 'scoped memory for _vae_forward_impl.1']
    #allocation11 [shape = 'u8[4096]{0}', space=vmem, size = 0x1000, scoped, tag = 'output window, operand 2, single buffered']
    %18 = vsyncpa [#allocation3], 0
    %19 = vsyncpa [#allocation6], 0
    %20 = vsyncpa [#allocation4], 0
    %21 = vsyncpa [#allocation10], 0
    // Predicated region
    $region2: #{_vae_forward_impl.1} parent=1 // pred_check
      _
    $region3: #{_vae_forward_impl.1} parent=1 // pred_check_branch
      %23 = sbr.rel (0) target = $region5
    $region4: #{_vae_forward_impl.1} parent=1 // pred_region
      _
    $region5: #{_vae_forward_impl.1} parent=1 // pred_fallthru
      _
    // Predicated region
    $region6: #{_vae_forward_impl.1} parent=1 // pred_check
      _
    $region7: #{_vae_forward_impl.1} parent=1 // pred_check_branch
      %25 = sbr.rel (0) target = $region9
    $region8: #{_vae_forward_impl.1} parent=1 // pred_region
      %s27 = ssub.s32 1024, 1024
      %28 = vsyncadd [#allocation3], %s27
      %s29 = sshll.u32 [#allocation2], 4
      %s30 = int_to_ptr.vmem [resolvable:$true] %s29
      %35 = dma.hbm_to_vmem [thread:$0]  %s1, 1024, %s30, [#allocation3], 64, 64, 4
    $region9: #{_vae_forward_impl.1} parent=1 // pred_fallthru
      _
    // Predicated region
    $region10: #{_vae_forward_impl.1} parent=1 // pred_check
      _
    $region11: #{_vae_forward_impl.1} parent=1 // pred_check_branch
      %37 = sbr.rel (0) target = $region13
    $region12: #{_vae_forward_impl.1} parent=1 // pred_region
      _
    $region13: #{_vae_forward_impl.1} parent=1 // pred_fallthru
      _
    // Predicated region
    $region14: #{_vae_forward_impl.1} parent=1 // pred_check
      _
    $region15: #{_vae_forward_impl.1} parent=1 // pred_check_branch
      %39 = sbr.rel (0) target = $region17
    $region16: #{_vae_forward_impl.1} parent=1 // pred_region
      %s41 = ssub.s32 2048, 2048
      %42 = vsyncadd [#allocation6], %s41
      %s43 = sshll.u32 [#allocation5], 4
      %s44 = int_to_ptr.vmem [resolvable:$true] %s43
      %49 = dma.hbm_to_vmem [thread:$0]  %s3, 2048, %s44, [#allocation6], 128, 128, 8
    $region17: #{_vae_forward_impl.1} parent=1 // pred_fallthru
      _
    // Predicated region
    $region18: #{_vae_forward_impl.1} parent=1 // pred_check
      _
    $region19: #{_vae_forward_impl.1} parent=1 // pred_check_branch
      %51 = sbr.rel (0) target = $region21
    $region20: #{_vae_forward_impl.1} parent=1 // pred_region
      _
    $region21: #{_vae_forward_impl.1} parent=1 // pred_fallthru
      _
    // Predicated region
    $region22: #{_vae_forward_impl.1} parent=1 // pred_check
      _
    $region23: #{_vae_forward_impl.1} parent=1 // pred_check_branch
      %53 = sbr.rel (0) target = $region25
    $region24: #{_vae_forward_impl.1} parent=1 // pred_region
      %s55 = ssub.s32 1024, 1024
      %56 = vsyncadd [#allocation6], %s55
      %s57 = sshll.u32 [#allocation7], 4
      %s58 = int_to_ptr.vmem [resolvable:$true] %s57
      %63 = dma.hbm_to_vmem [thread:$0]  %s5, 1024, %s58, [#allocation6], 64, 64, 4
    $region25: #{_vae_forward_impl.1} parent=1 // pred_fallthru
      _
    // Predicated region
    $region26: #{_vae_forward_impl.1} parent=1 // pred_check
      _
    $region27: #{_vae_forward_impl.1} parent=1 // pred_check_branch
      %65 = sbr.rel (0) target = $region29
    $region28: #{_vae_forward_impl.1} parent=1 // pred_region
      _
    $region29: #{_vae_forward_impl.1} parent=1 // pred_fallthru
      _
    // Predicated region
    $region30: #{_vae_forward_impl.1} parent=1 // pred_check
      _
    $region31: #{_vae_forward_impl.1} parent=1 // pred_check_branch
      %67 = sbr.rel (0) target = $region33
    $region32: #{_vae_forward_impl.1} parent=1 // pred_region
      _
    $region33: #{_vae_forward_impl.1} parent=1 // pred_fallthru
      _
    // Predicated region
    $region34: #{_vae_forward_impl.1} parent=1 // pred_check
      _
    $region35: #{_vae_forward_impl.1} parent=1 // pred_check_branch
      %69 = sbr.rel (0) target = $region37
    $region36: #{_vae_forward_impl.1} parent=1 // pred_region
      _
    $region37: #{_vae_forward_impl.1} parent=1 // pred_fallthru
      _
    // Predicated region
    $region38: #{_vae_forward_impl.1} parent=1 // pred_check
      _
    $region39: #{_vae_forward_impl.1} parent=1 // pred_check_branch
      %71 = sbr.rel (0) target = $region41
    $region40: #{_vae_forward_impl.1} parent=1 // pred_region
      _
    $region41: #{_vae_forward_impl.1} parent=1 // pred_fallthru
      _
    // Predicated region
    $region42: #{_vae_forward_impl.1} parent=1 // pred_check
      _
    $region43: #{_vae_forward_impl.1} parent=1 // pred_check_branch
      %73 = sbr.rel (0) target = $region45
    $region44: #{_vae_forward_impl.1} parent=1 // pred_region
      %74 = dma.done [#allocation3], 1024
    $region45: #{_vae_forward_impl.1} parent=1 // pred_fallthru
      _
    // Predicated region
    $region46: #{_vae_forward_impl.1} parent=1 // pred_check
      _
    $region47: #{_vae_forward_impl.1} parent=1 // pred_check_branch
      %76 = sbr.rel (0) target = $region49
    $region48: #{_vae_forward_impl.1} parent=1 // pred_region
      %77 = dma.done [#allocation6], 2048
    $region49: #{_vae_forward_impl.1} parent=1 // pred_fallthru
      _
    // Predicated region
    $region50: #{_vae_forward_impl.1} parent=1 // pred_check
      _
    $region51: #{_vae_forward_impl.1} parent=1 // pred_check_branch
      %79 = sbr.rel (0) target = $region53
    $region52: #{_vae_forward_impl.1} parent=1 // pred_region
      %80 = dma.done [#allocation6], 1024
    $region53: #{_vae_forward_impl.1} parent=1 // pred_fallthru
      _
    %v82 = vld [vmem:[%s0] sm:$0xf]
    %v83 = vld [vmem:[#allocation2] sm:$0xf]
    %v84 = vld [vmem:[#allocation2 + $0x4] sm:$0xf]
    %v85 = vld [vmem:[#allocation2 + $0x8] sm:$0xf]
    %v86 = vld [vmem:[#allocation2 + $0xc] sm:$0xf]
    %v87 = vld [vmem:[#allocation2 + $0x10] sm:$0xf]
    %v88 = vld [vmem:[#allocation2 + $0x14] sm:$0xf]
    %v89 = vld [vmem:[#allocation2 + $0x18] sm:$0xf]
    %v90 = vld [vmem:[#allocation2 + $0x1c] sm:$0xf]
    %v91 = vld [vmem:[#allocation2 + $0x20] sm:$0xf]
    %v92 = vld [vmem:[#allocation2 + $0x24] sm:$0xf]
    %v93 = vld [vmem:[#allocation2 + $0x28] sm:$0xf]
    %v94 = vld [vmem:[#allocation2 + $0x2c] sm:$0xf]
    %v95 = vld [vmem:[#allocation2 + $0x30] sm:$0xf]
    %v96 = vld [vmem:[#allocation2 + $0x34] sm:$0xf]
    %v97 = vld [vmem:[#allocation2 + $0x38] sm:$0xf]
    %v98 = vld [vmem:[#allocation2 + $0x3c] sm:$0xf]
    %v99 = vld [vmem:[%s2] sm:$0x1]
    %v101 = vlaneseq
    %v102 = vshrl.u32 %v101, 7
    %v103 = vsub.s32 0, %v102
    %v104 = vrot.slane %v99, %v103
    %v122 = vunpack.c.l.b16 %v83
    %v123 = vunpack.c.l.b16 %v84
    %v124 = vunpack.c.l.b16 %v85
    %v125 = vunpack.c.l.b16 %v86
    %v126 = vunpack.c.l.b16 %v87
    %v127 = vunpack.c.l.b16 %v88
    %v128 = vunpack.c.l.b16 %v89
    %v129 = vunpack.c.l.b16 %v90
    %v130 = vunpack.c.l.b16 %v91
    %v131 = vunpack.c.l.b16 %v92
    %v132 = vunpack.c.l.b16 %v93
    %v133 = vunpack.c.l.b16 %v94
    %v134 = vunpack.c.l.b16 %v95
    %v135 = vunpack.c.l.b16 %v96
    %v136 = vunpack.c.l.b16 %v97
    %v137 = vunpack.c.l.b16 %v98
    %v138 = vpack.c.b16 %v123, %v122
    %v139 = vpack.c.b16 %v125, %v124
    %v140 = vpack.c.b16 %v127, %v126
    %v141 = vpack.c.b16 %v129, %v128
    %v142 = vpack.c.b16 %v131, %v130
    %v143 = vpack.c.b16 %v133, %v132
    %v144 = vpack.c.b16 %v135, %v134
    %v145 = vpack.c.b16 %v137, %v136
    %154 = vmatprep.subr.bf16.mxu0 0
    %155 = vmatpush1.bf16.msra.mxu0 %v138
    %156 = vmatprep.subr.bf16.mxu0 0
    %157 = vmatpush1.bf16.msra.mxu0 %v139
    %158 = vmatprep.subr.bf16.mxu0 0
    %159 = vmatpush1.bf16.msra.mxu0 %v140
    %160 = vmatprep.subr.bf16.mxu0 0
    %161 = vmatpush1.bf16.msra.mxu0 %v141
    %162 = vmatprep.subr.bf16.mxu0 0
    %163 = vmatpush1.bf16.msra.mxu0 %v142
    %164 = vmatprep.subr.bf16.mxu0 0
    %165 = vmatpush1.bf16.msra.mxu0 %v143
    %166 = vmatprep.subr.bf16.mxu0 0
    %167 = vmatpush1.bf16.msra.mxu0 %v144
    %168 = vmatprep.subr.bf16.mxu0 0
    %169 = vmatpush1.bf16.msra.mxu0 %v145
    %170 = vmatprep.subr.bf16.mxu0 0
    %171 = vmatpush1.bf16.msra.mxu0 0
    %172 = vmatprep.subr.bf16.mxu0 0
    %173 = vmatpush1.bf16.msra.mxu0 0
    %174 = vmatprep.subr.bf16.mxu0 0
    %175 = vmatpush1.bf16.msra.mxu0 0
    %176 = vmatprep.subr.bf16.mxu0 0
    %177 = vmatpush1.bf16.msra.mxu0 0
    %178 = vmatprep.subr.bf16.mxu0 0
    %179 = vmatpush1.bf16.msra.mxu0 0
    %180 = vmatprep.subr.bf16.mxu0 0
    %181 = vmatpush1.bf16.msra.mxu0 0
    %182 = vmatprep.subr.bf16.mxu0 0
    %183 = vmatpush1.bf16.msra.mxu0 0
    %184 = vmatprep.subr.bf16.mxu0 0
    %185 = vmatpush1.bf16.msra.mxu0 0
    %186 = vmatprep.mubr.bf16.mxu0 0
    %187 = vmatmul.mubr.bf16.gmra.mrb[0].mxu0 %v82
    %v188 = vpop.f32.mrb[0].mxu0
    %v189 = vadd.f32 %v104, %v188
    %v190 = vpop.f32.mrb[0].mxu0
    %v191 = vpop.f32.mrb[0].mxu0
    %v192 = vpop.f32.mrb[0].mxu0
    %193 = vdwg.mxu0
    %v194 = vmax.f32 %v189, 0.0
    %v195 = vpack.c.bf16 %v194, %v194
    %v196 = vld [vmem:[#allocation5] sm:$0xff]
    %v197 = vld [vmem:[#allocation5 + $0x8] sm:$0xff]
    %v198 = vld [vmem:[#allocation5 + $0x10] sm:$0xff]
    %v199 = vld [vmem:[#allocation5 + $0x18] sm:$0xff]
    %v200 = vld [vmem:[#allocation5 + $0x20] sm:$0xff]
    %v201 = vld [vmem:[#allocation5 + $0x28] sm:$0xff]
    %v202 = vld [vmem:[#allocation5 + $0x30] sm:$0xff]
    %v203 = vld [vmem:[#allocation5 + $0x38] sm:$0xff]
    %v204 = vld [vmem:[#allocation5 + $0x40] sm:$0xff]
    %v205 = vld [vmem:[#allocation5 + $0x48] sm:$0xff]
    %v206 = vld [vmem:[#allocation5 + $0x50] sm:$0xff]
    %v207 = vld [vmem:[#allocation5 + $0x58] sm:$0xff]
    %v208 = vld [vmem:[#allocation5 + $0x60] sm:$0xff]
    %v209 = vld [vmem:[#allocation5 + $0x68] sm:$0xff]
    %v210 = vld [vmem:[#allocation5 + $0x70] sm:$0xff]
    %v211 = vld [vmem:[#allocation5 + $0x78] sm:$0xff]
    %v212 = vld [vmem:[%s4] sm:$0x3]
    %v214 = vlaneseq
    %v215 = vshrl.u32 %v214, 7
    %v216 = vsub.s32 0, %v215
    %v217 = vrot.slane %v212, %v216
    %v218 = vlaneseq
    %v219 = vshrl.u32 %v218, 7
    %v220 = vsub.s32 1, %v219
    %v221 = vrot.slane %v212, %v220
    %v240 = vunpack.c.l.b16 %v196
    %v241 = vunpack.c.h.b16 %v196
    %v242 = vunpack.c.l.b16 %v197
    %v243 = vunpack.c.h.b16 %v197
    %v244 = vunpack.c.l.b16 %v198
    %v245 = vunpack.c.h.b16 %v198
    %v246 = vunpack.c.l.b16 %v199
    %v247 = vunpack.c.h.b16 %v199
    %v248 = vunpack.c.l.b16 %v200
    %v249 = vunpack.c.h.b16 %v200
    %v250 = vunpack.c.l.b16 %v201
    %v251 = vunpack.c.h.b16 %v201
    %v252 = vunpack.c.l.b16 %v202
    %v253 = vunpack.c.h.b16 %v202
    %v254 = vunpack.c.l.b16 %v203
    %v255 = vunpack.c.h.b16 %v203
    %v256 = vunpack.c.l.b16 %v204
    %v257 = vunpack.c.h.b16 %v204
    %v258 = vunpack.c.l.b16 %v205
    %v259 = vunpack.c.h.b16 %v205
    %v260 = vunpack.c.l.b16 %v206
    %v261 = vunpack.c.h.b16 %v206
    %v262 = vunpack.c.l.b16 %v207
    %v263 = vunpack.c.h.b16 %v207
    %v264 = vunpack.c.l.b16 %v208
    %v265 = vunpack.c.h.b16 %v208
    %v266 = vunpack.c.l.b16 %v209
    %v267 = vunpack.c.h.b16 %v209
    %v268 = vunpack.c.l.b16 %v210
    %v269 = vunpack.c.h.b16 %v210
    %v270 = vunpack.c.l.b16 %v211
    %v271 = vunpack.c.h.b16 %v211
    %v272 = vpack.c.b16 %v242, %v240
    %v273 = vpack.c.b16 %v243, %v241
    %v274 = vpack.c.b16 %v246, %v244
    %v275 = vpack.c.b16 %v247, %v245
    %v276 = vpack.c.b16 %v250, %v248
    %v277 = vpack.c.b16 %v251, %v249
    %v278 = vpack.c.b16 %v254, %v252
    %v279 = vpack.c.b16 %v255, %v253
    %v280 = vpack.c.b16 %v258, %v256
    %v281 = vpack.c.b16 %v259, %v257
    %v282 = vpack.c.b16 %v262, %v260
    %v283 = vpack.c.b16 %v263, %v261
    %v284 = vpack.c.b16 %v266, %v264
    %v285 = vpack.c.b16 %v267, %v265
    %v286 = vpack.c.b16 %v270, %v268
    %v287 = vpack.c.b16 %v271, %v269
    %304 = vmatprep.subr.bf16.mxu0 %v273
    %305 = vmatpush1.bf16.msra.mxu0 %v272
    %306 = vmatprep.subr.bf16.mxu0 %v275
    %307 = vmatpush1.bf16.msra.mxu0 %v274
    %308 = vmatprep.subr.bf16.mxu0 %v277
    %309 = vmatpush1.bf16.msra.mxu0 %v276
    %310 = vmatprep.subr.bf16.mxu0 %v279
    %311 = vmatpush1.bf16.msra.mxu0 %v278
    %312 = vmatprep.subr.bf16.mxu0 %v281
    %313 = vmatpush1.bf16.msra.mxu0 %v280
    %314 = vmatprep.subr.bf16.mxu0 %v283
    %315 = vmatpush1.bf16.msra.mxu0 %v282
    %316 = vmatprep.subr.bf16.mxu0 %v285
    %317 = vmatpush1.bf16.msra.mxu0 %v284
    %318 = vmatprep.subr.bf16.mxu0 %v287
    %319 = vmatpush1.bf16.msra.mxu0 %v286
    %320 = vmatprep.subr.bf16.mxu0 0
    %321 = vmatpush1.bf16.msra.mxu0 0
    %322 = vmatprep.subr.bf16.mxu0 0
    %323 = vmatpush1.bf16.msra.mxu0 0
    %324 = vmatprep.subr.bf16.mxu0 0
    %325 = vmatpush1.bf16.msra.mxu0 0
    %326 = vmatprep.subr.bf16.mxu0 0
    %327 = vmatpush1.bf16.msra.mxu0 0
    %328 = vmatprep.subr.bf16.mxu0 0
    %329 = vmatpush1.bf16.msra.mxu0 0
    %330 = vmatprep.subr.bf16.mxu0 0
    %331 = vmatpush1.bf16.msra.mxu0 0
    %332 = vmatprep.subr.bf16.mxu0 0
    %333 = vmatpush1.bf16.msra.mxu0 0
    %334 = vmatprep.subr.bf16.mxu0 0
    %335 = vmatpush1.bf16.msra.mxu0 0
    %336 = vmatprep.mubr.bf16.mxu0 0
    %337 = vmatmul.mubr.bf16.gmra.mrb[0].mxu0 %v195
    %v338 = vpop.f32.mrb[0].mxu0
    %v339 = vadd.f32 %v217, %v338
    %v340 = vpop.f32.mrb[0].mxu0
    %v341 = vadd.f32 %v221, %v340
    %v342 = vpop.f32.mrb[0].mxu0
    %v343 = vpop.f32.mrb[0].mxu0
    %344 = vdwg.mxu0
    %v345 = vmul.f32 %v341, 0.5
    %v346 = vmul.f32 %v345, 1.442695
    %v347 = vpow.pop %v346
    %v348 = vld [vmem:[%s9] sm:$0xff]
    %v349 = vmul.f32 %v348, %v347
    %v350 = vadd.f32 %v339, %v349
    %v351 = vpack.c.bf16 %v350, %v350
    %v352 = vld [vmem:[#allocation7] sm:$0xf]
    %v353 = vld [vmem:[#allocation7 + $0x4] sm:$0xf]
    %v354 = vld [vmem:[#allocation7 + $0x8] sm:$0xf]
    %v355 = vld [vmem:[#allocation7 + $0xc] sm:$0xf]
    %v356 = vld [vmem:[#allocation7 + $0x10] sm:$0xf]
    %v357 = vld [vmem:[#allocation7 + $0x14] sm:$0xf]
    %v358 = vld [vmem:[#allocation7 + $0x18] sm:$0xf]
    %v359 = vld [vmem:[#allocation7 + $0x1c] sm:$0xf]
    %v360 = vld [vmem:[#allocation7 + $0x20] sm:$0xf]
    %v361 = vld [vmem:[#allocation7 + $0x24] sm:$0xf]
    %v362 = vld [vmem:[#allocation7 + $0x28] sm:$0xf]
    %v363 = vld [vmem:[#allocation7 + $0x2c] sm:$0xf]
    %v364 = vld [vmem:[#allocation7 + $0x30] sm:$0xf]
    %v365 = vld [vmem:[#allocation7 + $0x34] sm:$0xf]
    %v366 = vld [vmem:[#allocation7 + $0x38] sm:$0xf]
    %v367 = vld [vmem:[#allocation7 + $0x3c] sm:$0xf]
    %v368 = vld [vmem:[%s6] sm:$0x1]
    %v370 = vlaneseq
    %v371 = vshrl.u32 %v370, 7
    %v372 = vsub.s32 0, %v371
    %v373 = vrot.slane %v368, %v372
    %v391 = vunpack.c.l.b16 %v352
    %v392 = vunpack.c.l.b16 %v353
    %v393 = vunpack.c.l.b16 %v354
    %v394 = vunpack.c.l.b16 %v355
    %v395 = vunpack.c.l.b16 %v356
    %v396 = vunpack.c.l.b16 %v357
    %v397 = vunpack.c.l.b16 %v358
    %v398 = vunpack.c.l.b16 %v359
    %v399 = vunpack.c.l.b16 %v360
    %v400 = vunpack.c.l.b16 %v361
    %v401 = vunpack.c.l.b16 %v362
    %v402 = vunpack.c.l.b16 %v363
    %v403 = vunpack.c.l.b16 %v364
    %v404 = vunpack.c.l.b16 %v365
    %v405 = vunpack.c.l.b16 %v366
    %v406 = vunpack.c.l.b16 %v367
    %v407 = vpack.c.b16 %v392, %v391
    %v408 = vpack.c.b16 %v394, %v393
    %v409 = vpack.c.b16 %v396, %v395
    %v410 = vpack.c.b16 %v398, %v397
    %v411 = vpack.c.b16 %v400, %v399
    %v412 = vpack.c.b16 %v402, %v401
    %v413 = vpack.c.b16 %v404, %v403
    %v414 = vpack.c.b16 %v406, %v405
    %423 = vmatprep.subr.bf16.mxu0 0
    %424 = vmatpush1.bf16.msra.mxu0 %v407
    %425 = vmatprep.subr.bf16.mxu0 0
    %426 = vmatpush1.bf16.msra.mxu0 %v408
    %427 = vmatprep.subr.bf16.mxu0 0
    %428 = vmatpush1.bf16.msra.mxu0 %v409
    %429 = vmatprep.subr.bf16.mxu0 0
    %430 = vmatpush1.bf16.msra.mxu0 %v410
    %431 = vmatprep.subr.bf16.mxu0 0
    %432 = vmatpush1.bf16.msra.mxu0 %v411
    %433 = vmatprep.subr.bf16.mxu0 0
    %434 = vmatpush1.bf16.msra.mxu0 %v412
    %435 = vmatprep.subr.bf16.mxu0 0
    %436 = vmatpush1.bf16.msra.mxu0 %v413
    %437 = vmatprep.subr.bf16.mxu0 0
    %438 = vmatpush1.bf16.msra.mxu0 %v414
    %439 = vmatprep.subr.bf16.mxu0 0
    %440 = vmatpush1.bf16.msra.mxu0 0
    %441 = vmatprep.subr.bf16.mxu0 0
    %442 = vmatpush1.bf16.msra.mxu0 0
    %443 = vmatprep.subr.bf16.mxu0 0
    %444 = vmatpush1.bf16.msra.mxu0 0
    %445 = vmatprep.subr.bf16.mxu0 0
    %446 = vmatpush1.bf16.msra.mxu0 0
    %447 = vmatprep.subr.bf16.mxu0 0
    %448 = vmatpush1.bf16.msra.mxu0 0
    %449 = vmatprep.subr.bf16.mxu0 0
    %450 = vmatpush1.bf16.msra.mxu0 0
    %451 = vmatprep.subr.bf16.mxu0 0
    %452 = vmatpush1.bf16.msra.mxu0 0
    %453 = vmatprep.subr.bf16.mxu0 0
    %454 = vmatpush1.bf16.msra.mxu0 0
    %455 = vmatprep.mubr.bf16.mxu0 0
    %456 = vmatmul.mubr.bf16.gmra.mrb[0].mxu0 %v351
    %v457 = vpop.f32.mrb[0].mxu0
    %v458 = vadd.f32 %v373, %v457
    %v459 = vpop.f32.mrb[0].mxu0
    %v460 = vpop.f32.mrb[0].mxu0
    %v461 = vpop.f32.mrb[0].mxu0
    %462 = vdwg.mxu0
    %v463 = vmax.f32 %v458, 0.0
    %v464 = vpack.c.bf16 %v463, %v463
    %v465 = vld [vmem:[%s7] sm:$0xf]
    %v466 = vld [vmem:[%s7 + $0x4] sm:$0xf]
    %v467 = vld [vmem:[%s7 + $0x8] sm:$0xf]
    %v468 = vld [vmem:[%s7 + $0xc] sm:$0xf]
    %v469 = vld [vmem:[%s7 + $0x10] sm:$0xf]
    %v470 = vld [vmem:[%s7 + $0x14] sm:$0xf]
    %v471 = vld [vmem:[%s7 + $0x18] sm:$0xf]
    %v472 = vld [vmem:[%s7 + $0x1c] sm:$0xf]
    %v473 = vld [vmem:[%s7 + $0x20] sm:$0xf]
    %v474 = vld [vmem:[%s7 + $0x24] sm:$0xf]
    %v475 = vld [vmem:[%s7 + $0x28] sm:$0xf]
    %v476 = vld [vmem:[%s7 + $0x2c] sm:$0xf]
    %v477 = vld [vmem:[%s7 + $0x30] sm:$0xf]
    %v478 = vld [vmem:[%s7 + $0x34] sm:$0xf]
    %v479 = vld [vmem:[%s7 + $0x38] sm:$0xf]
    %v480 = vld [vmem:[%s7 + $0x3c] sm:$0xf]
    %v481 = vld [vmem:[%s8] sm:$0x1]
    %v483 = vlaneseq
    %v484 = vshrl.u32 %v483, 7
    %v485 = vsub.s32 0, %v484
    %v486 = vrot.slane %v481, %v485
    %v504 = vunpack.c.l.b16 %v465
    %v505 = vunpack.c.l.b16 %v466
    %v506 = vunpack.c.l.b16 %v467
    %v507 = vunpack.c.l.b16 %v468
    %v508 = vunpack.c.l.b16 %v469
    %v509 = vunpack.c.l.b16 %v470
    %v510 = vunpack.c.l.b16 %v471
    %v511 = vunpack.c.l.b16 %v472
    %v512 = vunpack.c.l.b16 %v473
    %v513 = vunpack.c.l.b16 %v474
    %v514 = vunpack.c.l.b16 %v475
    %v515 = vunpack.c.l.b16 %v476
    %v516 = vunpack.c.l.b16 %v477
    %v517 = vunpack.c.l.b16 %v478
    %v518 = vunpack.c.l.b16 %v479
    %v519 = vunpack.c.l.b16 %v480
    %v520 = vpack.c.b16 %v505, %v504
    %v521 = vpack.c.b16 %v507, %v506
    %v522 = vpack.c.b16 %v509, %v508
    %v523 = vpack.c.b16 %v511, %v510
    %v524 = vpack.c.b16 %v513, %v512
    %v525 = vpack.c.b16 %v515, %v514
    %v526 = vpack.c.b16 %v517, %v516
    %v527 = vpack.c.b16 %v519, %v518
    %536 = vmatprep.subr.bf16.mxu0 0
    %537 = vmatpush1.bf16.msra.mxu0 %v520
    %538 = vmatprep.subr.bf16.mxu0 0
    %539 = vmatpush1.bf16.msra.mxu0 %v521
    %540 = vmatprep.subr.bf16.mxu0 0
    %541 = vmatpush1.bf16.msra.mxu0 %v522
    %542 = vmatprep.subr.bf16.mxu0 0
    %543 = vmatpush1.bf16.msra.mxu0 %v523
    %544 = vmatprep.subr.bf16.mxu0 0
    %545 = vmatpush1.bf16.msra.mxu0 %v524
    %546 = vmatprep.subr.bf16.mxu0 0
    %547 = vmatpush1.bf16.msra.mxu0 %v525
    %548 = vmatprep.subr.bf16.mxu0 0
    %549 = vmatpush1.bf16.msra.mxu0 %v526
    %550 = vmatprep.subr.bf16.mxu0 0
    %551 = vmatpush1.bf16.msra.mxu0 %v527
    %552 = vmatprep.subr.bf16.mxu0 0
    %553 = vmatpush1.bf16.msra.mxu0 0
    %554 = vmatprep.subr.bf16.mxu0 0
    %555 = vmatpush1.bf16.msra.mxu0 0
    %556 = vmatprep.subr.bf16.mxu0 0
    %557 = vmatpush1.bf16.msra.mxu0 0
    %558 = vmatprep.subr.bf16.mxu0 0
    %559 = vmatpush1.bf16.msra.mxu0 0
    %560 = vmatprep.subr.bf16.mxu0 0
    %561 = vmatpush1.bf16.msra.mxu0 0
    %562 = vmatprep.subr.bf16.mxu0 0
    %563 = vmatpush1.bf16.msra.mxu0 0
    %564 = vmatprep.subr.bf16.mxu0 0
    %565 = vmatpush1.bf16.msra.mxu0 0
    %566 = vmatprep.subr.bf16.mxu0 0
    %567 = vmatpush1.bf16.msra.mxu0 0
    %568 = vmatprep.mubr.bf16.mxu0 0
    %569 = vmatmul.mubr.bf16.gmra.mrb[0].mxu0 %v464
    %v570 = vpop.f32.mrb[0].mxu0
    %v571 = vadd.f32 %v486, %v570
    %v572 = vpop.f32.mrb[0].mxu0
    %v573 = vpop.f32.mrb[0].mxu0
    %v574 = vpop.f32.mrb[0].mxu0
    %575 = vdwg.mxu0
    %v576 = vxor.u32 %v571, 2147483648
    %v577 = vmul.f32 %v576, 1.442695
    %v578 = vpow.pop %v577
    %v579 = vadd.f32 %v578, 1.0
    %v580 = vrcp.pop %v579
    %v581 = vmul.f32 1.0, %v580
    %582 = vst [vmem:[#allocation8] sm:$0xff] %v581
    %583 = vst [vmem:[#allocation9] sm:$0xff] %v339
    %584 = vst [vmem:[#allocation11] sm:$0xff] %v347
    // Predicated region
    $region54: #{_vae_forward_impl.1} parent=1 // pred_check
      _
    $region55: #{_vae_forward_impl.1} parent=1 // pred_check_branch
      %586 = sbr.rel (0) target = $region57
    $region56: #{_vae_forward_impl.1} parent=1 // pred_region
      %s588 = ssub.s32 128, 128
      %589 = vsyncadd [#allocation4], %s588
      %s591 = sshll.u32 [#allocation8], 4
      %s592 = int_to_ptr.vmem [resolvable:$true] %s591
      %594 = dma.vmem_to_hbm [thread:$0]  %s592, 128, %s10, [#allocation4]
    $region57: #{_vae_forward_impl.1} parent=1 // pred_fallthru
      _
    // Predicated region
    $region58: #{_vae_forward_impl.1} parent=1 // pred_check
      _
    $region59: #{_vae_forward_impl.1} parent=1 // pred_check_branch
      %596 = sbr.rel (0) target = $region61
    $region60: #{_vae_forward_impl.1} parent=1 // pred_region
      %s598 = ssub.s32 128, 128
      %599 = vsyncadd [#allocation10], %s598
      %s601 = sshll.u32 [#allocation9], 4
      %s602 = int_to_ptr.vmem [resolvable:$true] %s601
      %604 = dma.vmem_to_hbm [thread:$0]  %s602, 128, %s11, [#allocation10]
    $region61: #{_vae_forward_impl.1} parent=1 // pred_fallthru
      _
    // Predicated region
    $region62: #{_vae_forward_impl.1} parent=1 // pred_check
      _
    $region63: #{_vae_forward_impl.1} parent=1 // pred_check_branch
      %606 = sbr.rel (0) target = $region65
    $region64: #{_vae_forward_impl.1} parent=1 // pred_region
      %s608 = ssub.s32 128, 128
      %609 = vsyncadd [#allocation10], %s608
      %s611 = sshll.u32 [#allocation11], 4
      %s612 = int_to_ptr.vmem [resolvable:$true] %s611
      %614 = dma.vmem_to_hbm [thread:$0]  %s612, 128, %s12, [#allocation10]
    $region65: #{_vae_forward_impl.1} parent=1 // pred_fallthru
      _
    // Predicated region
    $region66: #{_vae_forward_impl.1} parent=1 // pred_check
      _
    $region67: #{_vae_forward_impl.1} parent=1 // pred_check_branch
      %616 = sbr.rel (0) target = $region69
    $region68: #{_vae_forward_impl.1} parent=1 // pred_region
      %617 = dma.done [#allocation4], 128
    $region69: #{_vae_forward_impl.1} parent=1 // pred_fallthru
      _
    // Predicated region
    $region70: #{_vae_forward_impl.1} parent=1 // pred_check
      _
    $region71: #{_vae_forward_impl.1} parent=1 // pred_check_branch
      %619 = sbr.rel (0) target = $region73
    $region72: #{_vae_forward_impl.1} parent=1 // pred_region
      %620 = dma.done [#allocation10], 128
    $region73: #{_vae_forward_impl.1} parent=1 // pred_fallthru
      _
    // Predicated region
    $region74: #{_vae_forward_impl.1} parent=1 // pred_check
      _
    $region75: #{_vae_forward_impl.1} parent=1 // pred_check_branch
      %622 = sbr.rel (0) target = $region77
    $region76: #{_vae_forward_impl.1} parent=1 // pred_region
      %623 = dma.done [#allocation10], 128
    $region77: #{_vae_forward_impl.1} parent=1 // pred_fallthru
      _
    %624 = vsyncpa [#allocation3], 1
    %625 = vsyncpa [#allocation6], 1
    %626 = vsyncpa [#allocation4], 1
    %627 = vsyncpa [#allocation10], 1

</llo_original>
